<compile_context>
chip_gen: v5e
topology: v5e:2x2
jax: 0.10.0
libtpu: 0.0.40
codegen_flags: <defaults>
</compile_context>

<pallas_src>
import functools
import math

import jax
import jax.numpy as jnp
from jax.experimental import pallas as pl
from jax.experimental.pallas import tpu as pltpu

LANE = 128        # TPU lane width (last dim)
SUBLANE_F32 = 8   # f32 sublane pack (batch-tile granularity)


def _round_up(x, m):
    return ((x + m - 1) // m) * m


def qvaluenet_kernel(x_ref, w1_ref, b1_ref, w2_ref, b2_ref, w3_ref, b3_ref, o_ref):
    """Fused 3-layer MLP on one batch tile: bf16 MXU operands, f32 accum + elementwise."""
    # x arrives as f32 straight from HBM; cast to bf16 in VMEM (VPU op, free vs. DMA).
    x = x_ref[...].astype(jnp.bfloat16)                               # (tb, S)
    h1 = jnp.dot(x, w1_ref[...], preferred_element_type=jnp.float32) + b1_ref[...]
    # If exact-f32 Q targets are required, drop these bf16 casts (precision knob).
    h1 = jnp.maximum(h1, 0.0).astype(jnp.bfloat16)                    # f32 ReLU, bf16 for MXU
    h2 = jnp.dot(h1, w2_ref[...], preferred_element_type=jnp.float32) + b2_ref[...]
    h2 = jnp.maximum(h2, 0.0).astype(jnp.bfloat16)
    o_ref[...] = (
        jnp.dot(h2, w3_ref[...], preferred_element_type=jnp.float32) + b3_ref[...]
    ).astype(o_ref.dtype)                                             # (tb, A) narrow f32 out


def init_params(key, state_dim, hidden_dim, action_dim):
    """xavier_uniform_ weights (as in weight_init), zero biases; stored (in, out)."""
    def xavier(k, fan_in, fan_out):
        bound = math.sqrt(6.0 / (fan_in + fan_out))
        return jax.random.uniform(
            k, (fan_in, fan_out), dtype=jnp.float32, minval=-bound, maxval=bound
        )

    k1, k2, k3 = jax.random.split(key, 3)
    return {
        "w1": xavier(k1, state_dim, hidden_dim),
        "b1": jnp.zeros((1, hidden_dim), jnp.float32),
        "w2": xavier(k2, hidden_dim, hidden_dim),
        "b2": jnp.zeros((1, hidden_dim), jnp.float32),
        "w3": xavier(k3, hidden_dim, action_dim),
        "b3": jnp.zeros((1, action_dim), jnp.float32),
    }


def prepare_params(params):
    """One-time (outside the per-step path) prep:
    pad ONLY the hidden dim to the lane width, cast matmul weights to bf16.
    state_dim (K of layer 1) and action_dim (N of layer 3) stay unpadded."""
    S, H = params["w1"].shape
    A = params["w3"].shape[1]
    Hp = _round_up(H, LANE)

    def pad_cols(a, c):
        return jnp.pad(a, ((0, 0), (0, c - a.shape[1])))

    return {
        "w1": pad_cols(params["w1"], Hp).astype(jnp.bfloat16),               # (S,  Hp)
        "b1": pad_cols(params["b1"], Hp),                                    # (1,  Hp) f32
        "w2": jnp.pad(params["w2"], ((0, Hp - H), (0, Hp - H))).astype(jnp.bfloat16),  # (Hp, Hp)
        "b2": pad_cols(params["b2"], Hp),                                    # (1,  Hp) f32
        "w3": jnp.pad(params["w3"], ((0, Hp - H), (0, 0))).astype(jnp.bfloat16),       # (Hp, A)
        "b3": params["b3"],                                                  # (1,  A) f32
    }


@functools.partial(jax.jit, static_argnames=("tile_b",))
def qvaluenet_forward(x, pparams, *, tile_b=1024):
    """x: (B, state_dim) f32. pparams: output of prepare_params. Returns (B, action_dim) f32."""
    B = x.shape[0]
    S, Hp = pparams["w1"].shape
    A = pparams["w3"].shape[1]

    # Batch tile: multiple of the f32 sublane pack. Split so the grid has >=2 steps when
    # the batch allows (v7x 2-TC sharding via "parallel"), capped at tile_b to amortize
    # the ~0.35us per-step overhead. Ragged last block is masked by Pallas (no batch pad).
    tb = max(SUBLANE_F32, min(tile_b, _round_up(pl.cdiv(B, 2), SUBLANE_F32)))
    grid = (pl.cdiv(B, tb),)

    # Real post-change traffic (unpadded S for x, narrow f32 output, bf16 weights).
    flops = 2 * B * (S * Hp + Hp * Hp + Hp * A)
    bytes_accessed = (
        B * S * 4                                  # x (f32, unpadded feature dim)
        + (S * Hp + Hp * Hp + Hp * A) * 2          # weights (bf16)
        + (Hp + Hp + A) * 4                        # biases (f32)
        + B * A * 4                                # output (f32, action_dim wide only)
    )

    return pl.pallas_call(
        qvaluenet_kernel,
        out_shape=jax.ShapeDtypeStruct((B, A), jnp.float32),
        grid=grid,
        in_specs=[
            pl.BlockSpec((tb, S), lambda i: (i, 0)),   # x: tiled over batch, full feature dim
            pl.BlockSpec((S, Hp), lambda i: (0, 0)),   # weights/biases: constant maps, VMEM-resident
            pl.BlockSpec((1, Hp), lambda i: (0, 0)),
            pl.BlockSpec((Hp, Hp), lambda i: (0, 0)),
            pl.BlockSpec((1, Hp), lambda i: (0, 0)),
            pl.BlockSpec((Hp, A), lambda i: (0, 0)),
            pl.BlockSpec((1, A), lambda i: (0, 0)),
        ],
        out_specs=pl.BlockSpec((tb, A), lambda i: (i, 0)),   # narrow output, no wrapper slice
        compiler_params=pltpu.CompilerParams(
            dimension_semantics=("parallel",),                # megacore / v7x 2-TC sharding
            vmem_limit_bytes=32 * 1024 * 1024,                # explicit (v5e default is 16 MiB)
        ),
        cost_estimate=pl.CostEstimate(
            flops=flops, transcendentals=0, bytes_accessed=bytes_accessed
        ),
    )(
        x,
        pparams["w1"], pparams["b1"],
        pparams["w2"], pparams["b2"],
        pparams["w3"], pparams["b3"],
    )


def reference_forward(x, p):
    h1 = jnp.maximum(x @ p["w1"] + p["b1"], 0.0)
    h2 = jnp.maximum(h1 @ p["w2"] + p["b2"], 0.0)
    return h2 @ p["w3"] + p["b3"]


def reference_forward_bf16(x, p):
    """Same bf16-operand / f32-accumulate recipe as the kernel, in plain XLA."""
    def mm(a, w):
        return jnp.dot(a.astype(jnp.bfloat16), w.astype(jnp.bfloat16),
                       preferred_element_type=jnp.float32)
    h1 = jnp.maximum(mm(x, p["w1"]) + p["b1"], 0.0)
    h2 = jnp.maximum(mm(h1, p["w2"]) + p["b2"], 0.0)
    return mm(h2, p["w3"]) + p["b3"]


if __name__ == "__main__":
    state_dim, hidden_dim, action_dim = 16, 32, 4
    batch = 8

    key = jax.random.PRNGKey(0)
    kx, kp = jax.random.split(key)
    x = jax.random.normal(kx, (batch, state_dim), dtype=jnp.float32)
    params = init_params(kp, state_dim, hidden_dim, action_dim)
    pparams = prepare_params(params)

    out = jax.block_until_ready(qvaluenet_forward(x, pparams))
    assert out.shape == (batch, action_dim)

    # Matches the bf16-operand / f32-accumulate reference tightly ...
    ref_bf16 = reference_forward_bf16(x, params)
    assert jnp.allclose(out, ref_bf16, atol=1e-3, rtol=1e-3)
    # ... and the full-f32 PyTorch-equivalent reference within bf16 precision.
    ref_f32 = reference_forward(x, params)
    assert jnp.allclose(out, ref_f32, atol=5e-2, rtol=5e-2)

    print("KERNEL_OK")
</pallas_src>

<mosaic_0001>
module attributes {stable_mosaic.version = 11 : i64} {
  func.func @qvaluenet_kernel(%arg0: i32, %arg1: memref<8x16xf32, #tpu.memory_space<vmem>>, %arg2: memref<16x128xbf16, #tpu.memory_space<vmem>>, %arg3: memref<1x128xf32, #tpu.memory_space<vmem>>, %arg4: memref<128x128xbf16, #tpu.memory_space<vmem>>, %arg5: memref<1x128xf32, #tpu.memory_space<vmem>>, %arg6: memref<128x4xbf16, #tpu.memory_space<vmem>>, %arg7: memref<1x4xf32, #tpu.memory_space<vmem>>, %arg8: memref<8x4xf32, #tpu.memory_space<vmem>>) attributes {dimension_semantics = [#tpu.dimension_semantics<parallel>], iteration_bounds = array<i64: 1>, scalar_prefetch = 0 : i64, scratch_operands = 0 : i64, tpu.core_type = #tpu.core_type<tc>, window_params = [{transform_indices = @transform_0, window_bounds = array<i64: 8, 16>}, {pipeline_mode = #tpu.pipeline_mode<synchronous>, transform_indices = @transform_1, window_bounds = array<i64: 16, 128>}, {pipeline_mode = #tpu.pipeline_mode<synchronous>, transform_indices = @transform_2, window_bounds = array<i64: 1, 128>}, {pipeline_mode = #tpu.pipeline_mode<synchronous>, transform_indices = @transform_3, window_bounds = array<i64: 128, 128>}, {pipeline_mode = #tpu.pipeline_mode<synchronous>, transform_indices = @transform_4, window_bounds = array<i64: 1, 128>}, {pipeline_mode = #tpu.pipeline_mode<synchronous>, transform_indices = @transform_5, window_bounds = array<i64: 128, 4>}, {pipeline_mode = #tpu.pipeline_mode<synchronous>, transform_indices = @transform_6, window_bounds = array<i64: 1, 4>}, {transform_indices = @transform_7, window_bounds = array<i64: 8, 4>}]} {
    %c0 = arith.constant 0 : index
    %c0_0 = arith.constant 0 : index
    %0 = vector.load %arg1[%c0, %c0_0] : memref<8x16xf32, #tpu.memory_space<vmem>>, vector<8x16xf32>
    %1 = arith.truncf %0 : vector<8x16xf32> to vector<8x16xbf16>
    %c0_1 = arith.constant 0 : index
    %c0_2 = arith.constant 0 : index
    %2 = vector.load %arg2[%c0_1, %c0_2] : memref<16x128xbf16, #tpu.memory_space<vmem>>, vector<16x128xbf16>
    %cst = arith.constant dense<0.000000e+00> : vector<8x128xf32>
    %3 = tpu.matmul %1, %2, %cst {dimension_numbers = #tpu.dot_dimension_numbers<[1], [0], [0], [1], [0, 0, 1, 1], [], []>} : vector<8x16xbf16>, vector<16x128xbf16>, vector<8x128xf32> -> vector<8x128xf32>
    %c0_3 = arith.constant 0 : index
    %c0_4 = arith.constant 0 : index
    %4 = vector.load %arg3[%c0_3, %c0_4] : memref<1x128xf32, #tpu.memory_space<vmem>>, vector<1x128xf32>
    %5 = vector.broadcast %4 : vector<1x128xf32> to vector<8x128xf32>
    %6 = arith.addf %3, %5 : vector<8x128xf32>
    %cst_5 = arith.constant 0.000000e+00 : f32
    %7 = vector.broadcast %cst_5 : f32 to vector<8x128xf32>
    %8 = arith.maximumf %6, %7 : vector<8x128xf32>
    %9 = arith.truncf %8 : vector<8x128xf32> to vector<8x128xbf16>
    %c0_6 = arith.constant 0 : index
    %c0_7 = arith.constant 0 : index
    %10 = vector.load %arg4[%c0_6, %c0_7] : memref<128x128xbf16, #tpu.memory_space<vmem>>, vector<128x128xbf16>
    %cst_8 = arith.constant dense<0.000000e+00> : vector<8x128xf32>
    %11 = tpu.matmul %9, %10, %cst_8 {dimension_numbers = #tpu.dot_dimension_numbers<[1], [0], [0], [1], [0, 0, 1, 1], [], []>} : vector<8x128xbf16>, vector<128x128xbf16>, vector<8x128xf32> -> vector<8x128xf32>
    %c0_9 = arith.constant 0 : index
    %c0_10 = arith.constant 0 : index
    %12 = vector.load %arg5[%c0_9, %c0_10] : memref<1x128xf32, #tpu.memory_space<vmem>>, vector<1x128xf32>
    %13 = vector.broadcast %12 : vector<1x128xf32> to vector<8x128xf32>
    %14 = arith.addf %11, %13 : vector<8x128xf32>
    %cst_11 = arith.constant 0.000000e+00 : f32
    %15 = vector.broadcast %cst_11 : f32 to vector<8x128xf32>
    %16 = arith.maximumf %14, %15 : vector<8x128xf32>
    %17 = arith.truncf %16 : vector<8x128xf32> to vector<8x128xbf16>
    %c0_12 = arith.constant 0 : index
    %c0_13 = arith.constant 0 : index
    %18 = vector.load %arg6[%c0_12, %c0_13] : memref<128x4xbf16, #tpu.memory_space<vmem>>, vector<128x4xbf16>
    %cst_14 = arith.constant dense<0.000000e+00> : vector<8x4xf32>
    %19 = tpu.matmul %17, %18, %cst_14 {dimension_numbers = #tpu.dot_dimension_numbers<[1], [0], [0], [1], [0, 0, 1, 1], [], []>} : vector<8x128xbf16>, vector<128x4xbf16>, vector<8x4xf32> -> vector<8x4xf32>
    %c0_15 = arith.constant 0 : index
    %c0_16 = arith.constant 0 : index
    %20 = vector.load %arg7[%c0_15, %c0_16] : memref<1x4xf32, #tpu.memory_space<vmem>>, vector<1x4xf32>
    %21 = vector.broadcast %20 : vector<1x4xf32> to vector<8x4xf32>
    %22 = arith.addf %19, %21 : vector<8x4xf32>
    %c0_17 = arith.constant 0 : index
    %c0_18 = arith.constant 0 : index
    %23 = vector.load %arg8[%c0_17, %c0_18] : memref<8x4xf32, #tpu.memory_space<vmem>>, vector<8x4xf32>
    tpu.vector_store %arg8[%c0_17, %c0_18], %22 {strides = array<i32>} : memref<8x4xf32, #tpu.memory_space<vmem>>, vector<8x4xf32>,
    return
  }
  func.func @transform_0(%arg0: i32) -> (i32, i32) {
    %c0_i32 = arith.constant 0 : i32
    %c0_i32_0 = arith.constant 0 : i32
    return %arg0, %c0_i32 : i32, i32
  }
  func.func @transform_1(%arg0: i32) -> (i32, i32) {
    %c0_i32 = arith.constant 0 : i32
    %c0_i32_0 = arith.constant 0 : i32
    %c0_i32_1 = arith.constant 0 : i32
    return %c0_i32, %c0_i32_0 : i32, i32
  }
  func.func @transform_2(%arg0: i32) -> (i32, i32) {
    %c0_i32 = arith.constant 0 : i32
    %c0_i32_0 = arith.constant 0 : i32
    %c0_i32_1 = arith.constant 0 : i32
    return %c0_i32, %c0_i32_0 : i32, i32
  }
  func.func @transform_3(%arg0: i32) -> (i32, i32) {
    %c0_i32 = arith.constant 0 : i32
    %c0_i32_0 = arith.constant 0 : i32
    %c0_i32_1 = arith.constant 0 : i32
    return %c0_i32, %c0_i32_0 : i32, i32
  }
  func.func @transform_4(%arg0: i32) -> (i32, i32) {
    %c0_i32 = arith.constant 0 : i32
    %c0_i32_0 = arith.constant 0 : i32
    %c0_i32_1 = arith.constant 0 : i32
    return %c0_i32, %c0_i32_0 : i32, i32
  }
  func.func @transform_5(%arg0: i32) -> (i32, i32) {
    %c0_i32 = arith.constant 0 : i32
    %c0_i32_0 = arith.constant 0 : i32
    %c0_i32_1 = arith.constant 0 : i32
    return %c0_i32, %c0_i32_0 : i32, i32
  }
  func.func @transform_6(%arg0: i32) -> (i32, i32) {
    %c0_i32 = arith.constant 0 : i32
    %c0_i32_0 = arith.constant 0 : i32
    %c0_i32_1 = arith.constant 0 : i32
    return %c0_i32, %c0_i32_0 : i32, i32
  }
  func.func @transform_7(%arg0: i32) -> (i32, i32) {
    %c0_i32 = arith.constant 0 : i32
    %c0_i32_0 = arith.constant 0 : i32
    return %arg0, %c0_i32 : i32, i32
  }
}

</mosaic_0001>

<llo_original>
// kernel: qvaluenet_forward.1
$region0: #{qvaluenet_forward.1}
  #allocation0 [shape = 'u32[]', space=smem, size = 0x4, offset = 0x4, fixed_abs, tag = 'smem constant byte address 0x4 - core index']
  #allocation1 [shape = 'u32[72,128]{1,0:T(1,128)}', space=vmem, size = 0x9000, scoped, tag = 'internal scratch']
  %s0 = inlined_call_operand.hbm [shape: f32[8,16], index: 0, kind: input, shape index: {}]
  %s1 = inlined_call_operand.hbm [shape: bf16[16,128], index: 1, kind: input, shape index: {}]
  %s2 = inlined_call_operand.vmem [shape: f32[1,128], index: 2, kind: input, shape index: {}]
  %s3 = inlined_call_operand.vmem [shape: bf16[128,128], index: 3, kind: input, shape index: {}]
  %s4 = inlined_call_operand.vmem [shape: f32[1,128], index: 4, kind: input, shape index: {}]
  %s5 = inlined_call_operand.vmem [shape: bf16[128,4], index: 5, kind: input, shape index: {}]
  %s6 = inlined_call_operand.vmem [shape: f32[1,4], index: 6, kind: input, shape index: {}]
  %s7 = inlined_call_operand.vmem [shape: f32[8,4], index: 7, kind: output, shape index: {}]
  %s8 = sld [smem:[#allocation0]]
  $region46: #{qvaluenet_forward.1} parent=0
    _
  %s10 = ssub.s32 1, %s8
  %s11 = scalar_select 0, %s10, %s8
  $region1: #{qvaluenet_forward.1} parent=0
    #allocation2 [shape = 'u8[4096]{0}', space=vmem, size = 0x1000, scoped, tag = 'input window, operand 0, single buffered']
    #allocation3 [shape = 's32[1]{0}', space=sflag, size = 0x4, scoped, tag = 'scoped memory for qvaluenet_forward.1']
    #allocation4 [shape = 'u8[4096]{0}', space=vmem, size = 0x1000, scoped, tag = 'input window, operand 1, single buffered']
    #allocation5 [shape = 's32[1]{0}', space=sflag, size = 0x4, scoped, tag = 'scoped memory for qvaluenet_forward.1']
    %12 = vsyncpa [#allocation3], 0
    %13 = vsyncpa [#allocation5], 0
    // Predicated region
    $region2: #{qvaluenet_forward.1} parent=1 // pred_check
      _
    $region3: #{qvaluenet_forward.1} parent=1 // pred_check_branch
      %15 = sbr.rel (0) target = $region5
    $region4: #{qvaluenet_forward.1} parent=1 // pred_region
      %17 = vsyncadd [#allocation3], 0
      %s19 = sshll.u32 %s0, 4
      %s20 = int_to_ptr.hbm [resolvable:$true] %s19
      %s21 = sshll.u32 [#allocation2], 4
      %s22 = int_to_ptr.vmem [resolvable:$true] %s21
      %24 = dma.hbm_to_vmem [thread:$0]  %s20, 128, %s22, [#allocation3]
    $region5: #{qvaluenet_forward.1} parent=1 // pred_fallthru
      _
    // Predicated region
    $region6: #{qvaluenet_forward.1} parent=1 // pred_check
      _
    $region7: #{qvaluenet_forward.1} parent=1 // pred_check_branch
      %26 = sbr.rel (0) target = $region9
    $region8: #{qvaluenet_forward.1} parent=1 // pred_region
      %28 = vsyncadd [#allocation5], 0
      %s29 = sshll.u32 %s1, 4
      %s30 = int_to_ptr.hbm [resolvable:$true] %s29
      %s31 = sshll.u32 [#allocation4], 4
      %s32 = int_to_ptr.vmem [resolvable:$true] %s31
      %37 = dma.hbm_to_vmem [thread:$0]  %s30, 128, %s32, [#allocation5], 64, 64, 4
    $region9: #{qvaluenet_forward.1} parent=1 // pred_fallthru
      _
    // Predicated region
    $region10: #{qvaluenet_forward.1} parent=1 // pred_check
      _
    $region11: #{qvaluenet_forward.1} parent=1 // pred_check_branch
      %39 = sbr.rel (0) target = $region13
    $region12: #{qvaluenet_forward.1} parent=1 // pred_region
      _
    $region13: #{qvaluenet_forward.1} parent=1 // pred_fallthru
      _
    // Predicated region
    $region14: #{qvaluenet_forward.1} parent=1 // pred_check
      _
    $region15: #{qvaluenet_forward.1} parent=1 // pred_check_branch
      %41 = sbr.rel (0) target = $region17
    $region16: #{qvaluenet_forward.1} parent=1 // pred_region
      _
    $region17: #{qvaluenet_forward.1} parent=1 // pred_fallthru
      _
    // Predicated region
    $region18: #{qvaluenet_forward.1} parent=1 // pred_check
      _
    $region19: #{qvaluenet_forward.1} parent=1 // pred_check_branch
      %43 = sbr.rel (0) target = $region21
    $region20: #{qvaluenet_forward.1} parent=1 // pred_region
      _
    $region21: #{qvaluenet_forward.1} parent=1 // pred_fallthru
      _
    // Predicated region
    $region22: #{qvaluenet_forward.1} parent=1 // pred_check
      _
    $region23: #{qvaluenet_forward.1} parent=1 // pred_check_branch
      %45 = sbr.rel (0) target = $region25
    $region24: #{qvaluenet_forward.1} parent=1 // pred_region
      _
    $region25: #{qvaluenet_forward.1} parent=1 // pred_fallthru
      _
    // Predicated region
    $region26: #{qvaluenet_forward.1} parent=1 // pred_check
      _
    $region27: #{qvaluenet_forward.1} parent=1 // pred_check_branch
      %47 = sbr.rel (0) target = $region29
    $region28: #{qvaluenet_forward.1} parent=1 // pred_region
      _
    $region29: #{qvaluenet_forward.1} parent=1 // pred_fallthru
      _
    // Predicated region
    $region30: #{qvaluenet_forward.1} parent=1 // pred_check
      _
    $region31: #{qvaluenet_forward.1} parent=1 // pred_check_branch
      %49 = sbr.rel (0) target = $region33
    $region32: #{qvaluenet_forward.1} parent=1 // pred_region
      %51 = dma.done [#allocation3], 128
    $region33: #{qvaluenet_forward.1} parent=1 // pred_fallthru
      _
    // Predicated region
    $region34: #{qvaluenet_forward.1} parent=1 // pred_check
      _
    $region35: #{qvaluenet_forward.1} parent=1 // pred_check_branch
      %53 = sbr.rel (0) target = $region37
    $region36: #{qvaluenet_forward.1} parent=1 // pred_region
      %55 = dma.done [#allocation5], 128
    $region37: #{qvaluenet_forward.1} parent=1 // pred_fallthru
      _
    %v57 = vld [vmem:[#allocation2] sm:$0xff]
    %v58 = vpack.c.bf16 %v57, %v57
    %v59 = vld [vmem:[#allocation4] sm:$0xf]
    %v60 = vld [vmem:[#allocation4 + $0x4] sm:$0xf]
    %v61 = vld [vmem:[%s2] sm:$0x1]
    %v63 = vperm.slane %v61, 0
    %v67 = vunpack.c.l.b16 %v59
    %v68 = vunpack.c.l.b16 %v60
    %v69 = vpack.c.b16 %v68, %v67
    %vm71 = vcmask 130048
    %v73 = vsel %vm71, %v58, 0
    %75 = vmatpush.bf16.msra.mxu0 0
    %76 = vmatpush.bf16.msra.mxu0 0
    %77 = vmatpush.bf16.msra.mxu0 0
    %78 = vmatpush.bf16.msra.mxu0 0
    %79 = vmatpush.bf16.msra.mxu0 0
    %80 = vmatpush.bf16.msra.mxu0 0
    %81 = vmatpush.bf16.msra.mxu0 0
    %82 = vmatpush.bf16.msra.mxu0 %v69
    %83 = vmatmul.bf16.gmra.mxu0 %v73
    %v84 = vpop.f32.mrf.mxu0
    %v85 = vadd.f32 %v63, %v84
    %v86 = vpop.f32.mrf.mxu0
    %87 = vdwg.mxu0
    %v88 = vmax.f32 %v85, 0.0
    %v89 = vpack.c.bf16 %v88, %v88
    %v90 = vld [vmem:[%s3] sm:$0xf]
    %v91 = vld [vmem:[%s3 + $0x4] sm:$0xf]
    %v92 = vld [vmem:[%s3 + $0x8] sm:$0xf]
    %v93 = vld [vmem:[%s3 + $0xc] sm:$0xf]
    %v94 = vld [vmem:[%s3 + $0x10] sm:$0xf]
    %v95 = vld [vmem:[%s3 + $0x14] sm:$0xf]
    %v96 = vld [vmem:[%s3 + $0x18] sm:$0xf]
    %v97 = vld [vmem:[%s3 + $0x1c] sm:$0xf]
    %v98 = vld [vmem:[%s3 + $0x20] sm:$0xf]
    %v99 = vld [vmem:[%s3 + $0x24] sm:$0xf]
    %v100 = vld [vmem:[%s3 + $0x28] sm:$0xf]
    %v101 = vld [vmem:[%s3 + $0x2c] sm:$0xf]
    %v102 = vld [vmem:[%s3 + $0x30] sm:$0xf]
    %v103 = vld [vmem:[%s3 + $0x34] sm:$0xf]
    %v104 = vld [vmem:[%s3 + $0x38] sm:$0xf]
    %v105 = vld [vmem:[%s3 + $0x3c] sm:$0xf]
    %v106 = vld [vmem:[%s4] sm:$0x1]
    %v108 = vperm.slane %v106, 0
    %v126 = vunpack.c.l.b16 %v90
    %v127 = vunpack.c.l.b16 %v91
    %v128 = vunpack.c.l.b16 %v92
    %v129 = vunpack.c.l.b16 %v93
    %v130 = vunpack.c.l.b16 %v94
    %v131 = vunpack.c.l.b16 %v95
    %v132 = vunpack.c.l.b16 %v96
    %v133 = vunpack.c.l.b16 %v97
    %v134 = vunpack.c.l.b16 %v98
    %v135 = vunpack.c.l.b16 %v99
    %v136 = vunpack.c.l.b16 %v100
    %v137 = vunpack.c.l.b16 %v101
    %v138 = vunpack.c.l.b16 %v102
    %v139 = vunpack.c.l.b16 %v103
    %v140 = vunpack.c.l.b16 %v104
    %v141 = vunpack.c.l.b16 %v105
    %v142 = vpack.c.b16 %v127, %v126
    %v143 = vpack.c.b16 %v129, %v128
    %v144 = vpack.c.b16 %v131, %v130
    %v145 = vpack.c.b16 %v133, %v132
    %v146 = vpack.c.b16 %v135, %v134
    %v147 = vpack.c.b16 %v137, %v136
    %v148 = vpack.c.b16 %v139, %v138
    %v149 = vpack.c.b16 %v141, %v140
    %158 = vmatpush.bf16.msra.mxu0 %v149
    %159 = vmatpush.bf16.msra.mxu0 %v148
    %160 = vmatpush.bf16.msra.mxu0 %v147
    %161 = vmatpush.bf16.msra.mxu0 %v146
    %162 = vmatpush.bf16.msra.mxu0 %v145
    %163 = vmatpush.bf16.msra.mxu0 %v144
    %164 = vmatpush.bf16.msra.mxu0 %v143
    %165 = vmatpush.bf16.msra.mxu0 %v142
    %166 = vmatmul.bf16.gmra.mxu0 %v89
    %v167 = vpop.f32.mrf.mxu0
    %v168 = vadd.f32 %v108, %v167
    %v169 = vpop.f32.mrf.mxu0
    %170 = vdwg.mxu0
    %v171 = vmax.f32 %v168, 0.0
    %v172 = vpack.c.bf16 %v171, %v171
    %v173 = vld [vmem:[%s5] sm:$0xf]
    %v174 = vld [vmem:[%s5 + $0x4] sm:$0xf]
    %v175 = vld [vmem:[%s5 + $0x8] sm:$0xf]
    %v176 = vld [vmem:[%s5 + $0xc] sm:$0xf]
    %v177 = vld [vmem:[%s5 + $0x10] sm:$0xf]
    %v178 = vld [vmem:[%s5 + $0x14] sm:$0xf]
    %v179 = vld [vmem:[%s5 + $0x18] sm:$0xf]
    %v180 = vld [vmem:[%s5 + $0x1c] sm:$0xf]
    %v181 = vld [vmem:[%s5 + $0x20] sm:$0xf]
    %v182 = vld [vmem:[%s5 + $0x24] sm:$0xf]
    %v183 = vld [vmem:[%s5 + $0x28] sm:$0xf]
    %v184 = vld [vmem:[%s5 + $0x2c] sm:$0xf]
    %v185 = vld [vmem:[%s5 + $0x30] sm:$0xf]
    %v186 = vld [vmem:[%s5 + $0x34] sm:$0xf]
    %v187 = vld [vmem:[%s5 + $0x38] sm:$0xf]
    %v188 = vld [vmem:[%s5 + $0x3c] sm:$0xf]
    %v189 = vld [vmem:[%s6] sm:$0x1]
    %v191 = vperm.slane %v189, 0
    %v209 = vunpack.c.l.b16 %v173
    %v210 = vunpack.c.l.b16 %v174
    %v211 = vunpack.c.l.b16 %v175
    %v212 = vunpack.c.l.b16 %v176
    %v213 = vunpack.c.l.b16 %v177
    %v214 = vunpack.c.l.b16 %v178
    %v215 = vunpack.c.l.b16 %v179
    %v216 = vunpack.c.l.b16 %v180
    %v217 = vunpack.c.l.b16 %v181
    %v218 = vunpack.c.l.b16 %v182
    %v219 = vunpack.c.l.b16 %v183
    %v220 = vunpack.c.l.b16 %v184
    %v221 = vunpack.c.l.b16 %v185
    %v222 = vunpack.c.l.b16 %v186
    %v223 = vunpack.c.l.b16 %v187
    %v224 = vunpack.c.l.b16 %v188
    %v225 = vpack.c.b16 %v210, %v209
    %v226 = vpack.c.b16 %v212, %v211
    %v227 = vpack.c.b16 %v214, %v213
    %v228 = vpack.c.b16 %v216, %v215
    %v229 = vpack.c.b16 %v218, %v217
    %v230 = vpack.c.b16 %v220, %v219
    %v231 = vpack.c.b16 %v222, %v221
    %v232 = vpack.c.b16 %v224, %v223
    %241 = vmatpush.bf16.msra.mxu0 %v232
    %242 = vmatpush.bf16.msra.mxu0 %v231
    %243 = vmatpush.bf16.msra.mxu0 %v230
    %244 = vmatpush.bf16.msra.mxu0 %v229
    %245 = vmatpush.bf16.msra.mxu0 %v228
    %246 = vmatpush.bf16.msra.mxu0 %v227
    %247 = vmatpush.bf16.msra.mxu0 %v226
    %248 = vmatpush.bf16.msra.mxu0 %v225
    %249 = vmatmul.bf16.gmra.mxu0 %v172
    %v250 = vpop.f32.mrf.mxu0
    %v251 = vadd.f32 %v191, %v250
    %v252 = vpop.f32.mrf.mxu0
    %253 = vdwg.mxu0
    %vm254 = vcmask 31744
    %255 = vst.msk [vmem:[%s7] sm:$0xff] %vm254, %v251
    // Predicated region
    $region38: #{qvaluenet_forward.1} parent=1 // pred_check
      _
    $region39: #{qvaluenet_forward.1} parent=1 // pred_check_branch
      %257 = sbr.rel (0) target = $region41
    $region40: #{qvaluenet_forward.1} parent=1 // pred_region
      _
    $region41: #{qvaluenet_forward.1} parent=1 // pred_fallthru
      _
    // Predicated region
    $region42: #{qvaluenet_forward.1} parent=1 // pred_check
      _
    $region43: #{qvaluenet_forward.1} parent=1 // pred_check_branch
      %259 = sbr.rel (0) target = $region45
    $region44: #{qvaluenet_forward.1} parent=1 // pred_region
      _
    $region45: #{qvaluenet_forward.1} parent=1 // pred_fallthru
      _
    %260 = vsyncpa [#allocation3], 1
    %261 = vsyncpa [#allocation5], 1

</llo_original>
